<compile_context>
chip_gen: v5e
topology: v5e:2x2
jax: 0.10.0
libtpu: 0.0.40
codegen_flags: <defaults>
</compile_context>

<pallas_src>
import functools

import jax
import jax.numpy as jnp
from jax.experimental import pallas as pl
from jax.experimental.pallas import tpu as pltpu


def _round_up(x, m):
    return ((x + m - 1) // m) * m


# -----------------------------------------------------------------------------
# Fused kernel: whole generator forward for one batch tile.
# refs = (x_ref, w1, b1, ..., wH, bH, w_out, b_out, o_ref)
# Weights are bf16 (stream dtype); biases are f32 (1, out).
# -----------------------------------------------------------------------------
def _generator_fused_kernel(*refs, n_hidden, negative_slope):
    x_ref = refs[0]
    o_ref = refs[-1]
    p = refs[1:-1]

    x = x_ref[...]                                   # bf16 activations
    idx = 0
    for _ in range(n_hidden):
        w = p[idx][...]                              # bf16 (in, out)
        b = p[idx + 1][...]                          # f32  (1, out) — broadcasts
        idx += 2
        # Linear (+ folded BatchNorm eval affine): bf16 MXU, f32 accumulate.
        y = jnp.dot(x, w, preferred_element_type=jnp.float32) + b
        # LeakyReLU(0.2) in f32; Dropout(0.3) is identity in eval mode.
        y = jnp.where(y > 0, y, negative_slope * y)
        x = y.astype(w.dtype)                        # back to bf16 for next MXU pass

    w_out = p[idx][...]
    b_out = p[idx + 1][...]
    y = jnp.dot(x, w_out, preferred_element_type=jnp.float32) + b_out
    # Lane-sparse (24-wide) store on purpose: padding to 128 lanes would 5.3x
    # the HBM write bytes of a memory-bound kernel.
    o_ref[...] = jnp.tanh(y).astype(o_ref.dtype)


# -----------------------------------------------------------------------------
# Wrapper: one pallas_call, batch-tiled grid, weights pinned VMEM-resident.
# -----------------------------------------------------------------------------
def generator_forward(z, flat_params, n_hidden, feature_dim,
                      *, tile_b=16384, negative_slope=0.2,
                      stream_dtype=jnp.bfloat16):
    B, latent = z.shape

    # Pick the number of grid steps FIRST (>=2 and even so both v7x TCs get
    # work via dimension_semantics=("parallel",)), THEN the tile size, so
    # batch padding is bounded by one 16-row sublane group, not a whole tile.
    n_steps = max(2, pl.cdiv(B, tile_b))
    if n_steps % 2:
        n_steps += 1
    tile = _round_up(pl.cdiv(B, n_steps), 16)   # 16-row multiple: bf16 sublane packing
    b_pad = n_steps * tile

    # bf16 streaming of the batch input; elementwise math stays f32 in-kernel.
    z_k = z.astype(stream_dtype)
    if b_pad != B:
        z_k = jnp.pad(z_k, ((0, b_pad - B), (0, 0)))

    # Weights (even entries) stream as bf16; biases (odd entries) stay f32.
    kernel_params = [arr.astype(stream_dtype) if i % 2 == 0 else arr
                     for i, arr in enumerate(flat_params)]

    # Activation tiles stream over the batch axis; every weight/bias block is
    # the full array and maps to block (0, 0) for every grid step -> resident,
    # no re-DMA per tile.
    in_specs = [pl.BlockSpec((tile, latent), lambda i: (i, 0))]
    for arr in kernel_params:
        in_specs.append(pl.BlockSpec(arr.shape, lambda i: (0, 0)))
    out_specs = pl.BlockSpec((tile, feature_dim), lambda i: (i, 0))

    kernel = functools.partial(
        _generator_fused_kernel,
        n_hidden=n_hidden,
        negative_slope=negative_slope,
    )

    out = pl.pallas_call(
        kernel,
        out_shape=jax.ShapeDtypeStruct((b_pad, feature_dim), stream_dtype),
        grid=(n_steps,),
        in_specs=in_specs,
        out_specs=out_specs,
        compiler_params=pltpu.CompilerParams(
            dimension_semantics=("parallel",),   # megacore-shard the batch axis
            vmem_limit_bytes=32 * 1024 * 1024,   # v5e scoped default is only 16 MiB
        ),
    )(z_k, *kernel_params)

    return out[:B] if b_pad != B else out


# -----------------------------------------------------------------------------
# Parameter init: PyTorch-style Linear init, BatchNorm(eval) folded in,
# biases pre-reshaped to (1, out) once here (not per forward call).
# Returns a flat f32 list [w1, b1, ..., wH, bH, w_out, b_out].
# -----------------------------------------------------------------------------
def init_generator_params(key, latent_dim, feature_dim, hidden_dims):
    bn_eps = 1e-5
    flat = []
    prev = latent_dim
    for h in hidden_dims:
        key, kw, kb = jax.random.split(key, 3)
        bound = 1.0 / float(prev) ** 0.5
        w = jax.random.uniform(kw, (prev, h), jnp.float32, -bound, bound)
        b = jax.random.uniform(kb, (h,), jnp.float32, -bound, bound)
        # BatchNorm1d eval-mode params (PyTorch defaults).
        gamma = jnp.ones((h,), jnp.float32)
        beta = jnp.zeros((h,), jnp.float32)
        running_mean = jnp.zeros((h,), jnp.float32)
        running_var = jnp.ones((h,), jnp.float32)
        scale = gamma / jnp.sqrt(running_var + bn_eps)
        shift = beta - running_mean * scale
        # Fold BN affine into the Linear (exact in eval mode).
        w_folded = w * scale[None, :]
        b_folded = (b * scale + shift).reshape(1, h)
        flat += [w_folded, b_folded]
        prev = h

    key, kw, kb = jax.random.split(key, 3)
    bound = 1.0 / float(prev) ** 0.5
    w_out = jax.random.uniform(kw, (prev, feature_dim), jnp.float32, -bound, bound)
    b_out = jax.random.uniform(kb, (feature_dim,), jnp.float32,
                               -bound, bound).reshape(1, feature_dim)
    flat += [w_out, b_out]
    return flat


# -----------------------------------------------------------------------------
# Pure-JAX f32 reference for sanity check.
# -----------------------------------------------------------------------------
def generator_forward_ref(z, flat_params, n_hidden, *, negative_slope=0.2):
    x = z
    idx = 0
    for _ in range(n_hidden):
        w, b = flat_params[idx], flat_params[idx + 1]
        idx += 2
        y = x @ w + b
        x = jnp.where(y > 0, y, negative_slope * y)
    w_out, b_out = flat_params[idx], flat_params[idx + 1]
    return jnp.tanh(x @ w_out + b_out)


if __name__ == "__main__":
    latent_dim = 16
    feature_dim = 24
    hidden_dims = [32, 64]
    batch = 8

    key = jax.random.PRNGKey(0)
    key, kz = jax.random.split(key)
    z = jax.random.normal(kz, (batch, latent_dim), jnp.float32)

    flat_params = init_generator_params(key, latent_dim, feature_dim, hidden_dims)
    n_hidden = len(hidden_dims)

    out = generator_forward(z, flat_params, n_hidden, feature_dim)
    out = jax.block_until_ready(out)

    ref = generator_forward_ref(z, flat_params, n_hidden)
    assert out.shape == (batch, feature_dim), out.shape
    # bf16 streaming vs f32 reference -> loosened tolerance (tanh output in [-1,1]).
    err = float(jnp.max(jnp.abs(out.astype(jnp.float32) - ref)))
    assert err < 2e-2, err

    print("KERNEL_OK")
</pallas_src>

<mosaic_0001>
module attributes {stable_mosaic.version = 11 : i64} {
  func.func @_generator_fused_kernel(%arg0: i32, %arg1: memref<16x16xbf16, #tpu.memory_space<vmem>>, %arg2: memref<16x32xbf16, #tpu.memory_space<vmem>>, %arg3: memref<1x32xf32, #tpu.memory_space<vmem>>, %arg4: memref<32x64xbf16, #tpu.memory_space<vmem>>, %arg5: memref<1x64xf32, #tpu.memory_space<vmem>>, %arg6: memref<64x24xbf16, #tpu.memory_space<vmem>>, %arg7: memref<1x24xf32, #tpu.memory_space<vmem>>, %arg8: memref<16x24xbf16, #tpu.memory_space<vmem>>) attributes {dimension_semantics = [#tpu.dimension_semantics<parallel>], iteration_bounds = array<i64: 2>, scalar_prefetch = 0 : i64, scratch_operands = 0 : i64, tpu.core_type = #tpu.core_type<tc>, window_params = [{transform_indices = @transform_0, window_bounds = array<i64: 16, 16>}, {pipeline_mode = #tpu.pipeline_mode<synchronous>, transform_indices = @transform_1, window_bounds = array<i64: 16, 32>}, {pipeline_mode = #tpu.pipeline_mode<synchronous>, transform_indices = @transform_2, window_bounds = array<i64: 1, 32>}, {pipeline_mode = #tpu.pipeline_mode<synchronous>, transform_indices = @transform_3, window_bounds = array<i64: 32, 64>}, {pipeline_mode = #tpu.pipeline_mode<synchronous>, transform_indices = @transform_4, window_bounds = array<i64: 1, 64>}, {pipeline_mode = #tpu.pipeline_mode<synchronous>, transform_indices = @transform_5, window_bounds = array<i64: 64, 24>}, {pipeline_mode = #tpu.pipeline_mode<synchronous>, transform_indices = @transform_6, window_bounds = array<i64: 1, 24>}, {transform_indices = @transform_7, window_bounds = array<i64: 16, 24>}]} {
    %c0 = arith.constant 0 : index
    %c0_0 = arith.constant 0 : index
    %0 = vector.load %arg1[%c0, %c0_0] : memref<16x16xbf16, #tpu.memory_space<vmem>>, vector<16x16xbf16>
    %c0_1 = arith.constant 0 : index
    %c0_2 = arith.constant 0 : index
    %1 = vector.load %arg2[%c0_1, %c0_2] : memref<16x32xbf16, #tpu.memory_space<vmem>>, vector<16x32xbf16>
    %c0_3 = arith.constant 0 : index
    %c0_4 = arith.constant 0 : index
    %2 = vector.load %arg3[%c0_3, %c0_4] : memref<1x32xf32, #tpu.memory_space<vmem>>, vector<1x32xf32>
    %cst = arith.constant dense<0.000000e+00> : vector<16x32xf32>
    %3 = tpu.matmul %0, %1, %cst {dimension_numbers = #tpu.dot_dimension_numbers<[1], [0], [0], [1], [0, 0, 1, 1], [], []>} : vector<16x16xbf16>, vector<16x32xbf16>, vector<16x32xf32> -> vector<16x32xf32>
    %4 = vector.broadcast %2 : vector<1x32xf32> to vector<16x32xf32>
    %5 = arith.addf %3, %4 : vector<16x32xf32>
    %cst_5 = arith.constant 0.000000e+00 : f32
    %6 = vector.broadcast %cst_5 : f32 to vector<16x32xf32>
    %7 = arith.cmpf ogt, %5, %6 : vector<16x32xf32>
    %cst_6 = arith.constant 2.000000e-01 : f32
    %8 = vector.broadcast %cst_6 : f32 to vector<16x32xf32>
    %9 = arith.mulf %8, %5 : vector<16x32xf32>
    %10 = arith.select %7, %5, %9 : vector<16x32xi1>, vector<16x32xf32>
    %11 = arith.truncf %10 : vector<16x32xf32> to vector<16x32xbf16>
    %c0_7 = arith.constant 0 : index
    %c0_8 = arith.constant 0 : index
    %12 = vector.load %arg4[%c0_7, %c0_8] : memref<32x64xbf16, #tpu.memory_space<vmem>>, vector<32x64xbf16>
    %c0_9 = arith.constant 0 : index
    %c0_10 = arith.constant 0 : index
    %13 = vector.load %arg5[%c0_9, %c0_10] : memref<1x64xf32, #tpu.memory_space<vmem>>, vector<1x64xf32>
    %cst_11 = arith.constant dense<0.000000e+00> : vector<16x64xf32>
    %14 = tpu.matmul %11, %12, %cst_11 {dimension_numbers = #tpu.dot_dimension_numbers<[1], [0], [0], [1], [0, 0, 1, 1], [], []>} : vector<16x32xbf16>, vector<32x64xbf16>, vector<16x64xf32> -> vector<16x64xf32>
    %15 = vector.broadcast %13 : vector<1x64xf32> to vector<16x64xf32>
    %16 = arith.addf %14, %15 : vector<16x64xf32>
    %cst_12 = arith.constant 0.000000e+00 : f32
    %17 = vector.broadcast %cst_12 : f32 to vector<16x64xf32>
    %18 = arith.cmpf ogt, %16, %17 : vector<16x64xf32>
    %cst_13 = arith.constant 2.000000e-01 : f32
    %19 = vector.broadcast %cst_13 : f32 to vector<16x64xf32>
    %20 = arith.mulf %19, %16 : vector<16x64xf32>
    %21 = arith.select %18, %16, %20 : vector<16x64xi1>, vector<16x64xf32>
    %22 = arith.truncf %21 : vector<16x64xf32> to vector<16x64xbf16>
    %c0_14 = arith.constant 0 : index
    %c0_15 = arith.constant 0 : index
    %23 = vector.load %arg6[%c0_14, %c0_15] : memref<64x24xbf16, #tpu.memory_space<vmem>>, vector<64x24xbf16>
    %c0_16 = arith.constant 0 : index
    %c0_17 = arith.constant 0 : index
    %24 = vector.load %arg7[%c0_16, %c0_17] : memref<1x24xf32, #tpu.memory_space<vmem>>, vector<1x24xf32>
    %cst_18 = arith.constant dense<0.000000e+00> : vector<16x24xf32>
    %25 = tpu.matmul %22, %23, %cst_18 {dimension_numbers = #tpu.dot_dimension_numbers<[1], [0], [0], [1], [0, 0, 1, 1], [], []>} : vector<16x64xbf16>, vector<64x24xbf16>, vector<16x24xf32> -> vector<16x24xf32>
    %26 = vector.broadcast %24 : vector<1x24xf32> to vector<16x24xf32>
    %27 = arith.addf %25, %26 : vector<16x24xf32>
    %28 = math.tanh %27 : vector<16x24xf32>
    %29 = arith.truncf %28 : vector<16x24xf32> to vector<16x24xbf16>
    %c0_19 = arith.constant 0 : index
    %c0_20 = arith.constant 0 : index
    %30 = vector.load %arg8[%c0_19, %c0_20] : memref<16x24xbf16, #tpu.memory_space<vmem>>, vector<16x24xbf16>
    tpu.vector_store %arg8[%c0_19, %c0_20], %29 {strides = array<i32>} : memref<16x24xbf16, #tpu.memory_space<vmem>>, vector<16x24xbf16>,
    return
  }
  func.func @transform_0(%arg0: i32) -> (i32, i32) {
    %c0_i32 = arith.constant 0 : i32
    %c0_i32_0 = arith.constant 0 : i32
    return %arg0, %c0_i32 : i32, i32
  }
  func.func @transform_1(%arg0: i32) -> (i32, i32) {
    %c0_i32 = arith.constant 0 : i32
    %c0_i32_0 = arith.constant 0 : i32
    %c0_i32_1 = arith.constant 0 : i32
    return %c0_i32, %c0_i32_0 : i32, i32
  }
  func.func @transform_2(%arg0: i32) -> (i32, i32) {
    %c0_i32 = arith.constant 0 : i32
    %c0_i32_0 = arith.constant 0 : i32
    %c0_i32_1 = arith.constant 0 : i32
    return %c0_i32, %c0_i32_0 : i32, i32
  }
  func.func @transform_3(%arg0: i32) -> (i32, i32) {
    %c0_i32 = arith.constant 0 : i32
    %c0_i32_0 = arith.constant 0 : i32
    %c0_i32_1 = arith.constant 0 : i32
    return %c0_i32, %c0_i32_0 : i32, i32
  }
  func.func @transform_4(%arg0: i32) -> (i32, i32) {
    %c0_i32 = arith.constant 0 : i32
    %c0_i32_0 = arith.constant 0 : i32
    %c0_i32_1 = arith.constant 0 : i32
    return %c0_i32, %c0_i32_0 : i32, i32
  }
  func.func @transform_5(%arg0: i32) -> (i32, i32) {
    %c0_i32 = arith.constant 0 : i32
    %c0_i32_0 = arith.constant 0 : i32
    %c0_i32_1 = arith.constant 0 : i32
    return %c0_i32, %c0_i32_0 : i32, i32
  }
  func.func @transform_6(%arg0: i32) -> (i32, i32) {
    %c0_i32 = arith.constant 0 : i32
    %c0_i32_0 = arith.constant 0 : i32
    %c0_i32_1 = arith.constant 0 : i32
    return %c0_i32, %c0_i32_0 : i32, i32
  }
  func.func @transform_7(%arg0: i32) -> (i32, i32) {
    %c0_i32 = arith.constant 0 : i32
    %c0_i32_0 = arith.constant 0 : i32
    return %arg0, %c0_i32 : i32, i32
  }
}

</mosaic_0001>

<llo_original>
// kernel: tpu_custom_call.1
$region0: #{tpu_custom_call.1}
  #allocation0 [shape = 'u32[]', space=smem, size = 0x4, offset = 0x4, fixed_abs, tag = 'smem constant byte address 0x4 - core index']
  #allocation1 [shape = 'u32[72,128]{1,0:T(1,128)}', space=vmem, size = 0x9000, scoped, tag = 'internal scratch']
  %s0 = inlined_call_operand.vmem [shape: bf16[32,16], index: 0, kind: input, shape index: {}]
  %s1 = inlined_call_operand.vmem [shape: bf16[16,32], index: 1, kind: input, shape index: {}]
  %s2 = inlined_call_operand.vmem [shape: f32[1,32], index: 2, kind: input, shape index: {}]
  %s3 = inlined_call_operand.vmem [shape: bf16[32,64], index: 3, kind: input, shape index: {}]
  %s4 = inlined_call_operand.vmem [shape: f32[1,64], index: 4, kind: input, shape index: {}]
  %s5 = inlined_call_operand.vmem [shape: bf16[64,24], index: 5, kind: input, shape index: {}]
  %s6 = inlined_call_operand.vmem [shape: f32[1,24], index: 6, kind: input, shape index: {}]
  %s7 = inlined_call_operand.vmem [shape: bf16[32,24], index: 7, kind: output, shape index: {}]
  %s8 = sld [smem:[#allocation0]]
  $region61: #{tpu_custom_call.1} parent=0
    _
  %s10 = ssub.s32 1, %s8
  %s11 = scalar_select 0, %s10, %s8
  loop: start=0, step=1, limit=4
  $region2: #{tpu_custom_call.1} parent=0 // loop_pre_header
    _
  $region3: #{tpu_custom_call.1} parent=0 // loop_header
    %s13 = sphi 0, %s17
    %p14 = scmp.ge.s32.totalorder %s13, 4
    %s23 = sphi 0, %s25
    %s26 = sphi 0, %s23
    %s27 = sphi 0, %s26
    %s43 = sphi 0, %s27
    %s47 = sphi 0, %s47
    %s49 = sphi 0, %s47
    %s50 = sphi 0, %s49
    %s64 = sphi 0, %s50
    %s68 = sphi 0, %s68
    %s70 = sphi 0, %s68
    %s71 = sphi 0, %s70
    %s85 = sphi 0, %s71
    %s89 = sphi 0, %s89
    %s91 = sphi 0, %s89
    %s92 = sphi 0, %s91
    %s106 = sphi 0, %s92
    %s110 = sphi 0, %s110
    %s112 = sphi 0, %s110
    %s113 = sphi 0, %s112
    %s127 = sphi 0, %s113
    %s131 = sphi 0, %s131
    %s133 = sphi 0, %s131
    %s134 = sphi 0, %s133
    %s148 = sphi 0, %s134
    %s152 = sphi 0, %s152
    %s154 = sphi 0, %s152
    %s155 = sphi 0, %s154
    %s169 = sphi 0, %s155
    %s175 = sphi 0, %s177
    %s178 = sphi 0, %s175
    %s179 = sphi 0, %s178
    %s195 = sphi 0, %s179
  $region4: #{tpu_custom_call.1} parent=0 // loop_header_branch
    %16 = sbr.rel (%p14) target = $region8
  $region5: #{tpu_custom_call.1} parent=0 // loop_body
    %s18 = ssub.s32 %s13, 1
    %s19 = ssub.s32 %s13, 2
    %s20 = sadd.s32 %s13, 1
    %s21 = ssub.s32 %s13, %s20
    %p22 = scmp.eq.s32.totalorder %s21, 0
    %s24 = sadd.s32 %s23, 1
    %s25 = scalar_select %p22, %s23, %s24
    %p28 = pneg %p22
    %p29 = scmp.eq.s32.totalorder %s13, 1
    %p30 = por %p28, %p29
    %p31 = scmp.ne.s32.totalorder %s23, %s26
    %p32 = scmp.eq.s32.totalorder %s13, 0
    %p33 = por %p31, %p32
    %p34 = scmp.ne.s32.totalorder %s23, %s26
    %p35 = scmp.eq.s32.totalorder %s18, 1
    %p36 = por %p34, %p35
    %p37 = scmp.ne.s32.totalorder %s26, %s27
    %p38 = scmp.eq.s32.totalorder %s18, 0
    %p39 = por %p37, %p38
    %p40 = scmp.ne.s32.totalorder %s26, %s27
    %p41 = scmp.eq.s32.totalorder %s19, 1
    %p42 = por %p40, %p41
    %p44 = scmp.ne.s32.totalorder %s27, %s43
    %p45 = scmp.eq.s32.totalorder %s19, 0
    %p46 = por %p44, %p45
    %s48 = sadd.s32 %s47, 1
    %p51 = scmp.eq.s32.totalorder %s13, 1
    %p52 = scmp.ne.s32.totalorder %s47, %s49
    %p53 = scmp.eq.s32.totalorder %s13, 0
    %p54 = por %p52, %p53
    %p55 = scmp.ne.s32.totalorder %s47, %s49
    %p56 = scmp.eq.s32.totalorder %s18, 1
    %p57 = por %p55, %p56
    %p58 = scmp.ne.s32.totalorder %s49, %s50
    %p59 = scmp.eq.s32.totalorder %s18, 0
    %p60 = por %p58, %p59
    %p61 = scmp.ne.s32.totalorder %s49, %s50
    %p62 = scmp.eq.s32.totalorder %s19, 1
    %p63 = por %p61, %p62
    %p65 = scmp.ne.s32.totalorder %s50, %s64
    %p66 = scmp.eq.s32.totalorder %s19, 0
    %p67 = por %p65, %p66
    %s69 = sadd.s32 %s68, 1
    %p72 = scmp.eq.s32.totalorder %s13, 1
    %p73 = scmp.ne.s32.totalorder %s68, %s70
    %p74 = scmp.eq.s32.totalorder %s13, 0
    %p75 = por %p73, %p74
    %p76 = scmp.ne.s32.totalorder %s68, %s70
    %p77 = scmp.eq.s32.totalorder %s18, 1
    %p78 = por %p76, %p77
    %p79 = scmp.ne.s32.totalorder %s70, %s71
    %p80 = scmp.eq.s32.totalorder %s18, 0
    %p81 = por %p79, %p80
    %p82 = scmp.ne.s32.totalorder %s70, %s71
    %p83 = scmp.eq.s32.totalorder %s19, 1
    %p84 = por %p82, %p83
    %p86 = scmp.ne.s32.totalorder %s71, %s85
    %p87 = scmp.eq.s32.totalorder %s19, 0
    %p88 = por %p86, %p87
    %s90 = sadd.s32 %s89, 1
    %p93 = scmp.eq.s32.totalorder %s13, 1
    %p94 = scmp.ne.s32.totalorder %s89, %s91
    %p95 = scmp.eq.s32.totalorder %s13, 0
    %p96 = por %p94, %p95
    %p97 = scmp.ne.s32.totalorder %s89, %s91
    %p98 = scmp.eq.s32.totalorder %s18, 1
    %p99 = por %p97, %p98
    %p100 = scmp.ne.s32.totalorder %s91, %s92
    %p101 = scmp.eq.s32.totalorder %s18, 0
    %p102 = por %p100, %p101
    %p103 = scmp.ne.s32.totalorder %s91, %s92
    %p104 = scmp.eq.s32.totalorder %s19, 1
    %p105 = por %p103, %p104
    %p107 = scmp.ne.s32.totalorder %s92, %s106
    %p108 = scmp.eq.s32.totalorder %s19, 0
    %p109 = por %p107, %p108
    %s111 = sadd.s32 %s110, 1
    %p114 = scmp.eq.s32.totalorder %s13, 1
    %p115 = scmp.ne.s32.totalorder %s110, %s112
    %p116 = scmp.eq.s32.totalorder %s13, 0
    %p117 = por %p115, %p116
    %p118 = scmp.ne.s32.totalorder %s110, %s112
    %p119 = scmp.eq.s32.totalorder %s18, 1
    %p120 = por %p118, %p119
    %p121 = scmp.ne.s32.totalorder %s112, %s113
    %p122 = scmp.eq.s32.totalorder %s18, 0
    %p123 = por %p121, %p122
    %p124 = scmp.ne.s32.totalorder %s112, %s113
    %p125 = scmp.eq.s32.totalorder %s19, 1
    %p126 = por %p124, %p125
    %p128 = scmp.ne.s32.totalorder %s113, %s127
    %p129 = scmp.eq.s32.totalorder %s19, 0
    %p130 = por %p128, %p129
    %s132 = sadd.s32 %s131, 1
    %p135 = scmp.eq.s32.totalorder %s13, 1
    %p136 = scmp.ne.s32.totalorder %s131, %s133
    %p137 = scmp.eq.s32.totalorder %s13, 0
    %p138 = por %p136, %p137
    %p139 = scmp.ne.s32.totalorder %s131, %s133
    %p140 = scmp.eq.s32.totalorder %s18, 1
    %p141 = por %p139, %p140
    %p142 = scmp.ne.s32.totalorder %s133, %s134
    %p143 = scmp.eq.s32.totalorder %s18, 0
    %p144 = por %p142, %p143
    %p145 = scmp.ne.s32.totalorder %s133, %s134
    %p146 = scmp.eq.s32.totalorder %s19, 1
    %p147 = por %p145, %p146
    %p149 = scmp.ne.s32.totalorder %s134, %s148
    %p150 = scmp.eq.s32.totalorder %s19, 0
    %p151 = por %p149, %p150
    %s153 = sadd.s32 %s152, 1
    %p156 = scmp.eq.s32.totalorder %s13, 1
    %p157 = scmp.ne.s32.totalorder %s152, %s154
    %p158 = scmp.eq.s32.totalorder %s13, 0
    %p159 = por %p157, %p158
    %p160 = scmp.ne.s32.totalorder %s152, %s154
    %p161 = scmp.eq.s32.totalorder %s18, 1
    %p162 = por %p160, %p161
    %p163 = scmp.ne.s32.totalorder %s154, %s155
    %p164 = scmp.eq.s32.totalorder %s18, 0
    %p165 = por %p163, %p164
    %p166 = scmp.ne.s32.totalorder %s154, %s155
    %p167 = scmp.eq.s32.totalorder %s19, 1
    %p168 = por %p166, %p167
    %p170 = scmp.ne.s32.totalorder %s155, %s169
    %p171 = scmp.eq.s32.totalorder %s19, 0
    %p172 = por %p170, %p171
    %s173 = ssub.s32 %s13, %s20
    %p174 = scmp.eq.s32.totalorder %s173, 0
    %s176 = sadd.s32 %s175, 1
    %s177 = scalar_select %p174, %s175, %s176
    %p180 = pneg %p174
    %p181 = scmp.eq.s32.totalorder %s13, 1
    %p182 = por %p180, %p181
    %p183 = scmp.ne.s32.totalorder %s175, %s178
    %p184 = scmp.eq.s32.totalorder %s13, 0
    %p185 = por %p183, %p184
    %p186 = scmp.ne.s32.totalorder %s175, %s178
    %p187 = scmp.eq.s32.totalorder %s18, 1
    %p188 = por %p186, %p187
    %p189 = scmp.ne.s32.totalorder %s178, %s179
    %p190 = scmp.eq.s32.totalorder %s18, 0
    %p191 = por %p189, %p190
    %p192 = scmp.ne.s32.totalorder %s178, %s179
    %p193 = scmp.eq.s32.totalorder %s19, 1
    %p194 = por %p192, %p193
    %p196 = scmp.ne.s32.totalorder %s179, %s195
    %p197 = scmp.eq.s32.totalorder %s19, 0
    %p198 = por %p196, %p197
    %p199 = scmp.le.s32.totalorder 1, %s13
    %p200 = scmp.lt.s32.totalorder %s13, 3
    %p201 = pnand %p199, %p200
    %p202 = pneg %p201
    // Predicated region
    $region9: #{tpu_custom_call.1} parent=5 // pred_check
      _
    $region10: #{tpu_custom_call.1} parent=5 // pred_check_branch
      %204 = sbr.rel (%p201) target = $region12
    $region11: #{tpu_custom_call.1} parent=5 // pred_region
      %s205 = ssub.s32 %s13, 1
      // Predicated region
      $region13: #{tpu_custom_call.1} parent=11 // pred_check
        %p206 = pneg %p60
      $region14: #{tpu_custom_call.1} parent=11 // pred_check_branch
        %208 = sbr.rel (%p206) target = $region16
      $region15: #{tpu_custom_call.1} parent=11 // pred_region
        _
      $region16: #{tpu_custom_call.1} parent=11 // pred_fallthru
        _
      // Predicated region
      $region17: #{tpu_custom_call.1} parent=11 // pred_check
        %p209 = pneg %p81
      $region18: #{tpu_custom_call.1} parent=11 // pred_check_branch
        %211 = sbr.rel (%p209) target = $region20
      $region19: #{tpu_custom_call.1} parent=11 // pred_region
        _
      $region20: #{tpu_custom_call.1} parent=11 // pred_fallthru
        _
      // Predicated region
      $region21: #{tpu_custom_call.1} parent=11 // pred_check
        %p212 = pneg %p102
      $region22: #{tpu_custom_call.1} parent=11 // pred_check_branch
        %214 = sbr.rel (%p212) target = $region24
      $region23: #{tpu_custom_call.1} parent=11 // pred_region
        _
      $region24: #{tpu_custom_call.1} parent=11 // pred_fallthru
        _
      // Predicated region
      $region25: #{tpu_custom_call.1} parent=11 // pred_check
        %p215 = pneg %p123
      $region26: #{tpu_custom_call.1} parent=11 // pred_check_branch
        %217 = sbr.rel (%p215) target = $region28
      $region27: #{tpu_custom_call.1} parent=11 // pred_region
        _
      $region28: #{tpu_custom_call.1} parent=11 // pred_fallthru
        _
      // Predicated region
      $region29: #{tpu_custom_call.1} parent=11 // pred_check
        %p218 = pneg %p144
      $region30: #{tpu_custom_call.1} parent=11 // pred_check_branch
        %220 = sbr.rel (%p218) target = $region32
      $region31: #{tpu_custom_call.1} parent=11 // pred_region
        _
      $region32: #{tpu_custom_call.1} parent=11 // pred_fallthru
        _
      // Predicated region
      $region33: #{tpu_custom_call.1} parent=11 // pred_check
        %p221 = pneg %p165
      $region34: #{tpu_custom_call.1} parent=11 // pred_check_branch
        %223 = sbr.rel (%p221) target = $region36
      $region35: #{tpu_custom_call.1} parent=11 // pred_region
        _
      $region36: #{tpu_custom_call.1} parent=11 // pred_fallthru
        _
    $region12: #{tpu_custom_call.1} parent=5 // pred_fallthru
      _
    %p224 = scmp.lt.s32.totalorder %s13, 2
    // Predicated region
    $region37: #{tpu_custom_call.1} parent=5 // pred_check
      %p225 = pneg %p224
    $region38: #{tpu_custom_call.1} parent=5 // pred_check_branch
      %227 = sbr.rel (%p225) target = $region40
    $region39: #{tpu_custom_call.1} parent=5 // pred_region
      // Predicated region
      $region41: #{tpu_custom_call.1} parent=39 // pred_check
        %p228 = pneg %p33
      $region42: #{tpu_custom_call.1} parent=39 // pred_check_branch
        %230 = sbr.rel (%p228) target = $region44
      $region43: #{tpu_custom_call.1} parent=39 // pred_region
        %s231 = smul.u32 2, %s13
        %p232 = scmp.lt.s32.totalorder %s231, 3
        %s233 = scalar_select %p232, %s231, 3
        %s234 = smul.addr %s233, 4
        %s235 = scalar_lea.vmem %s0, %s234
        %s236 = smul.u32 2, %s13
      $region44: #{tpu_custom_call.1} parent=39 // pred_fallthru
        _
    $region40: #{tpu_custom_call.1} parent=5 // pred_fallthru
      _
    %p237 = scmp.le.s32.totalorder 1, %s13
    %p238 = scmp.lt.s32.totalorder %s13, 3
    %p239 = pnand %p237, %p238
    %p240 = pneg %p239
    // Predicated region
    $region45: #{tpu_custom_call.1} parent=5 // pred_check
      _
    $region46: #{tpu_custom_call.1} parent=5 // pred_check_branch
      %242 = sbr.rel (%p239) target = $region48
    $region47: #{tpu_custom_call.1} parent=5 // pred_region
      %s243 = ssub.s32 %s13, 1
      %s244 = smul.u32 2, %s18
      %p245 = scmp.lt.s32.totalorder %s244, 3
      %s246 = scalar_select %p245, %s244, 3
      %s247 = smul.addr %s246, 4
      %s248 = scalar_lea.vmem %s0, %s247
      %p249 = pneg %p39
      %p250 = pneg %p36
      %p251 = pneg %p60
      %p252 = pneg %p57
      %p253 = pneg %p81
      %p254 = pneg %p78
      %p255 = pneg %p102
      %p256 = pneg %p99
      %p257 = pneg %p123
      %p258 = pneg %p120
      %p259 = pneg %p144
      %p260 = pneg %p141
      %p261 = pneg %p165
      %p262 = pneg %p162
      %p263 = pneg %p191
      %p264 = pneg %p188
      %s265 = smul.u32 2, %s18
      %p266 = scmp.lt.s32.totalorder %s265, 3
      %s267 = scalar_select %p266, %s265, 3
      %s268 = smul.addr %s267, 4
      %s269 = scalar_lea.vmem %s7, %s268
      %s270 = smul.u32 2, %s18
      %p271 = scmp.lt.s32.totalorder %s270, 3
      %s272 = scalar_select %p271, %s270, 3
      %s273 = smul.addr %s272, 4
      %s274 = scalar_lea.vmem %s0, %s273
      %s275 = smul.u32 2, %s18
      %s276 = smul.u32 2, %s18
      %p277 = scmp.lt.s32.totalorder %s276, 3
      %s278 = scalar_select %p277, %s276, 3
      %s279 = smul.addr %s278, 4
      %s280 = scalar_lea.vmem %s7, %s279
      %s281 = smul.u32 2, %s18
      %v283 = vld [vmem:[%s274] sm:$0xf]
      %v284 = vld [vmem:[%s274 + $0x4] sm:$0xf]
      %v285 = vld [vmem:[%s1] sm:$0xf]
      %v286 = vld [vmem:[%s1 + $0x4] sm:$0xf]
      %v287 = vld [vmem:[%s2] sm:$0x1]
      %v289 = vperm.slane %v287, 0
      %v293 = vunpack.c.l.b16 %v283
      %v294 = vunpack.c.l.b16 %v284
      %v295 = vpack.c.b16 %v294, %v293
      %v298 = vunpack.c.l.b16 %v285
      %v299 = vunpack.c.l.b16 %v286
      %v300 = vpack.c.b16 %v299, %v298
      %vm302 = vcmask 130048
      %v304 = vsel %vm302, %v295, 0
      %306 = vmatpush.bf16.msra.mxu0 0
      %307 = vmatpush.bf16.msra.mxu0 0
      %308 = vmatpush.bf16.msra.mxu0 0
      %309 = vmatpush.bf16.msra.mxu0 0
      %310 = vmatpush.bf16.msra.mxu0 0
      %311 = vmatpush.bf16.msra.mxu0 0
      %312 = vmatpush.bf16.msra.mxu0 0
      %313 = vmatpush.bf16.msra.mxu0 %v300
      %314 = vmatmul.bf16.gmra.mxu0 %v304
      %v315 = vpop.f32.mrf.mxu0
      %v316 = vadd.f32 %v289, %v315
      %v317 = vpop.f32.mrf.mxu0
      %v318 = vadd.f32 %v289, %v317
      %319 = vdwg.mxu0
      %vm320 = vcmp.gt.f32.partialorder %v316, 0.0
      %vm321 = vcmp.gt.f32.partialorder %v318, 0.0
      %v322 = vmul.f32 %v316, 0.2
      %v323 = vmul.f32 %v318, 0.2
      %v324 = vsel %vm320, %v316, %v322
      %v325 = vsel %vm321, %v318, %v323
      %v326 = vpack.c.bf16 %v325, %v324
      %v327 = vld [vmem:[%s3] sm:$0xf]
      %v328 = vld [vmem:[%s3 + $0x4] sm:$0xf]
      %v329 = vld [vmem:[%s3 + $0x8] sm:$0xf]
      %v330 = vld [vmem:[%s3 + $0xc] sm:$0xf]
      %v331 = vld [vmem:[%s4] sm:$0x1]
      %v333 = vperm.slane %v331, 0
      %v339 = vunpack.c.l.b16 %v327
      %v340 = vunpack.c.l.b16 %v328
      %v341 = vunpack.c.l.b16 %v329
      %v342 = vunpack.c.l.b16 %v330
      %v343 = vpack.c.b16 %v340, %v339
      %v344 = vpack.c.b16 %v342, %v341
      %vm347 = vcmask 261120
      %v349 = vsel %vm347, %v326, 0
      %351 = vmatpush.bf16.msra.mxu0 0
      %352 = vmatpush.bf16.msra.mxu0 0
      %353 = vmatpush.bf16.msra.mxu0 0
      %354 = vmatpush.bf16.msra.mxu0 0
      %355 = vmatpush.bf16.msra.mxu0 0
      %356 = vmatpush.bf16.msra.mxu0 0
      %357 = vmatpush.bf16.msra.mxu0 %v344
      %358 = vmatpush.bf16.msra.mxu0 %v343
      %359 = vmatmul.bf16.gmra.mxu0 %v349
      %v360 = vpop.f32.mrf.mxu0
      %v361 = vadd.f32 %v333, %v360
      %v362 = vpop.f32.mrf.mxu0
      %v363 = vadd.f32 %v333, %v362
      %364 = vdwg.mxu0
      %vm365 = vcmp.gt.f32.partialorder %v361, 0.0
      %vm366 = vcmp.gt.f32.partialorder %v363, 0.0
      %v367 = vmul.f32 %v361, 0.2
      %v368 = vmul.f32 %v363, 0.2
      %v369 = vsel %vm365, %v361, %v367
      %v370 = vsel %vm366, %v363, %v368
      %v371 = vpack.c.bf16 %v370, %v369
      %v372 = vld [vmem:[%s5] sm:$0xf]
      %v373 = vld [vmem:[%s5 + $0x4] sm:$0xf]
      %v374 = vld [vmem:[%s5 + $0x8] sm:$0xf]
      %v375 = vld [vmem:[%s5 + $0xc] sm:$0xf]
      %v376 = vld [vmem:[%s5 + $0x10] sm:$0xf]
      %v377 = vld [vmem:[%s5 + $0x14] sm:$0xf]
      %v378 = vld [vmem:[%s5 + $0x18] sm:$0xf]
      %v379 = vld [vmem:[%s5 + $0x1c] sm:$0xf]
      %v380 = vld [vmem:[%s6] sm:$0x1]
      %v382 = vperm.slane %v380, 0
      %v392 = vunpack.c.l.b16 %v372
      %v393 = vunpack.c.l.b16 %v373
      %v394 = vunpack.c.l.b16 %v374
      %v395 = vunpack.c.l.b16 %v375
      %v396 = vunpack.c.l.b16 %v376
      %v397 = vunpack.c.l.b16 %v377
      %v398 = vunpack.c.l.b16 %v378
      %v399 = vunpack.c.l.b16 %v379
      %v400 = vpack.c.b16 %v393, %v392
      %v401 = vpack.c.b16 %v395, %v394
      %v402 = vpack.c.b16 %v397, %v396
      %v403 = vpack.c.b16 %v399, %v398
      %vm408 = vcmask 523264
      %v410 = vsel %vm408, %v371, 0
      %412 = vmatpush.bf16.msra.mxu0 0
      %413 = vmatpush.bf16.msra.mxu0 0
      %414 = vmatpush.bf16.msra.mxu0 0
      %415 = vmatpush.bf16.msra.mxu0 0
      %416 = vmatpush.bf16.msra.mxu0 %v403
      %417 = vmatpush.bf16.msra.mxu0 %v402
      %418 = vmatpush.bf16.msra.mxu0 %v401
      %419 = vmatpush.bf16.msra.mxu0 %v400
      %420 = vmatmul.bf16.gmra.mxu0 %v410
      %v421 = vpop.f32.mrf.mxu0
      %v422 = vadd.f32 %v382, %v421
      %v423 = vpop.f32.mrf.mxu0
      %v424 = vadd.f32 %v382, %v423
      %425 = vdwg.mxu0
      %v426 = vtanh.pop %v422
      %v427 = vtanh.pop %v424
      %v428 = vpack.c.bf16 %v426, %v426
      %v429 = vpack.c.bf16 %v427, %v427
      %vm430 = vcmask 191488
      %431 = vst.msk [vmem:[%s280] sm:$0xf] %vm430, %v428
      %432 = vst.msk [vmem:[%s280 + $0x4] sm:$0xf] %vm430, %v429
      %s433 = smul.u32 2, %s18
      %p434 = scmp.lt.s32.totalorder %s433, 3
      %s435 = scalar_select %p434, %s433, 3
      %s436 = smul.addr %s435, 4
      %s437 = scalar_lea.vmem %s7, %s436
      // Predicated region
      $region49: #{tpu_custom_call.1} parent=47 // pred_check
        %p438 = pneg %p188
      $region50: #{tpu_custom_call.1} parent=47 // pred_check_branch
        %440 = sbr.rel (%p438) target = $region52
      $region51: #{tpu_custom_call.1} parent=47 // pred_region
        %s441 = smul.u32 2, %s18
      $region52: #{tpu_custom_call.1} parent=47 // pred_fallthru
        _
    $region48: #{tpu_custom_call.1} parent=5 // pred_fallthru
      _
    %p442 = scmp.le.s32.totalorder 2, %s13
    // Predicated region
    $region53: #{tpu_custom_call.1} parent=5 // pred_check
      %p443 = pneg %p442
    $region54: #{tpu_custom_call.1} parent=5 // pred_check_branch
      %445 = sbr.rel (%p443) target = $region56
    $region55: #{tpu_custom_call.1} parent=5 // pred_region
      %s446 = ssub.s32 %s13, 2
      // Predicated region
      $region57: #{tpu_custom_call.1} parent=55 // pred_check
        %p447 = pneg %p194
      $region58: #{tpu_custom_call.1} parent=55 // pred_check_branch
        %449 = sbr.rel (%p447) target = $region60
      $region59: #{tpu_custom_call.1} parent=55 // pred_region
        %s450 = smul.u32 2, %s19
        %p451 = scmp.lt.s32.totalorder %s450, 3
        %s452 = scalar_select %p451, %s450, 3
        %s453 = smul.addr %s452, 4
        %s454 = scalar_lea.vmem %s7, %s453
      $region60: #{tpu_custom_call.1} parent=55 // pred_fallthru
        _
    $region56: #{tpu_custom_call.1} parent=5 // pred_fallthru
      _
  $region6: #{tpu_custom_call.1} parent=0 // loop_footer
    %s17 = sadd.s32 1, %s13
  $region7: #{tpu_custom_call.1} parent=0 // loop_footer_branch
    %12 = sbr.rel target = $region3
  $region8: #{tpu_custom_call.1} parent=0 // loop_exit
    _

</llo_original>
